<compile_context>
chip_gen: v7x
topology: tpu7x:2x2x1
jax: 0.10.0
libtpu: 0.0.40
codegen_flags: <defaults>
</compile_context>

<pallas_src>
import functools

import jax
import jax.numpy as jnp
from jax.experimental import pallas as pl
from jax.experimental.pallas import tpu as pltpu


def _round_up(x, m):
    return (x + m - 1) // m * m


def _gated_trans_kernel(x_ref, w_ref, b_ref, o_ref, *, out_dim):
    x = x_ref[...]

    # Single fused MXU pass: [tm, in_dim] @ [in_dim, 2*out_dim] -> [tm, 2*out_dim]
    pre = jnp.dot(x, w_ref[...], preferred_element_type=jnp.float32) + b_ref[...]

    # Lane-aligned split (out_dim is a multiple of 128).
    y_pre = pre[:, :out_dim]
    g_pre = pre[:, out_dim:]

    x_y = jnp.tanh(y_pre)                                   # EUP
    x_g = jnp.where(g_pre > 0, g_pre, 0.01 * g_pre)         # VPU (LeakyReLU, slope 0.01)

    o_ref[...] = (x_y * x_g).astype(o_ref.dtype)


def gated_trans(x, wy, by, wg, bg, *, tm=256):
    """x: [..., in_dim] -> [..., out_dim].

    wy, wg: [in_dim, out_dim] (already transposed vs. PyTorch's [out, in]).
    by, bg: [out_dim].
    """
    in_dim = x.shape[-1]
    out_dim = wy.shape[-1]
    lead = x.shape[:-1]

    x2 = x.reshape(-1, in_dim)
    M = x2.shape[0]
    itemsize = jnp.dtype(x.dtype).itemsize

    # --- lane-dense output: pad out_dim up to a multiple of 128 -------------
    out_p = _round_up(out_dim, 128)
    if out_p != out_dim:
        pad = out_p - out_dim
        wy_p = jnp.pad(wy, ((0, 0), (0, pad)))
        wg_p = jnp.pad(wg, ((0, 0), (0, pad)))
        by_p = jnp.pad(by, (0, pad))
        bg_p = jnp.pad(bg, (0, pad))
    else:
        wy_p, wg_p, by_p, bg_p = wy, wg, by, bg

    # --- fuse the two matmuls into one weight / bias ------------------------
    w_fused = jnp.concatenate([wy_p, wg_p], axis=1)                   # [in_dim, 2*out_p]
    b_fused = jnp.concatenate([by_p, bg_p], axis=0).reshape(1, 2 * out_p)

    # --- row tiling: large tile, pad M so any batch*seq works ---------------
    tm_eff = min(tm, _round_up(M, 8))
    M_p = _round_up(M, tm_eff)
    if M_p != M:
        x2 = jnp.pad(x2, ((0, M_p - M), (0, 0)))
    grid = (M_p // tm_eff,)

    # --- VMEM budget: double-buffered x/out tiles + resident fused weight ---
    # TODO(synk): for very large in_dim*out_dim on v7x (64 MiB/TC), add an N
    # grid axis (tn=256 on v6e/v7x, 128 on v5e) instead of keeping W resident.
    vmem_bytes = 2 * (tm_eff * in_dim + tm_eff * out_p) * itemsize \
        + (in_dim * 2 * out_p + 2 * out_p) * itemsize
    vmem_limit = int(min(2 * vmem_bytes + (16 << 20), 64 << 20))

    cost = pl.CostEstimate(
        flops=2 * M_p * in_dim * (2 * out_p),
        transcendentals=M_p * out_p,
        bytes_accessed=(M_p * in_dim + in_dim * 2 * out_p + 2 * out_p + M_p * out_p) * itemsize,
    )

    out2 = pl.pallas_call(
        functools.partial(_gated_trans_kernel, out_dim=out_p),
        out_shape=jax.ShapeDtypeStruct((M_p, out_p), x.dtype),
        grid_spec=pltpu.PrefetchScalarGridSpec(
            num_scalar_prefetch=0,
            grid=grid,
            in_specs=[
                pl.BlockSpec((tm_eff, in_dim), lambda i: (i, 0)),        # x row-tile
                pl.BlockSpec((in_dim, 2 * out_p), lambda i: (0, 0)),     # fused Wy|Wg (resident)
                pl.BlockSpec((1, 2 * out_p), lambda i: (0, 0)),          # fused by|bg (resident)
            ],
            out_specs=pl.BlockSpec((tm_eff, out_p), lambda i: (i, 0)),
        ),
        compiler_params=pltpu.CompilerParams(
            dimension_semantics=("parallel",),
            vmem_limit_bytes=vmem_limit,
        ),
        cost_estimate=cost,
    )(x2, w_fused, b_fused)

    out2 = out2[:M, :out_dim]
    return out2.reshape(*lead, out_dim)


def init_params(key, in_dim, out_dim, dtype=jnp.float32):
    """kaiming_uniform-style init (bound = sqrt(6/fan_in)), zero bias."""
    ky, kg = jax.random.split(key)
    bound = (6.0 / in_dim) ** 0.5
    # stored as [in_dim, out_dim] == PyTorch weight.T
    wy = jax.random.uniform(ky, (in_dim, out_dim), dtype, minval=-bound, maxval=bound)
    wg = jax.random.uniform(kg, (in_dim, out_dim), dtype, minval=-bound, maxval=bound)
    by = jnp.zeros((out_dim,), dtype)
    bg = jnp.zeros((out_dim,), dtype)
    return wy, by, wg, bg


def gated_trans_ref(x, wy, by, wg, bg):
    x_y = jnp.tanh(x @ wy + by)
    pre = x @ wg + bg
    x_g = jnp.where(pre > 0, pre, 0.01 * pre)
    return x_y * x_g


if __name__ == "__main__":
    key = jax.random.PRNGKey(0)
    kx, kp = jax.random.split(key)

    batch, seq, in_dim, out_dim = 2, 8, 32, 32
    x = jax.random.normal(kx, (batch, seq, in_dim), jnp.float32)
    wy, by, wg, bg = init_params(kp, in_dim, out_dim)

    out = gated_trans(x, wy, by, wg, bg)
    out = jax.block_until_ready(out)

    ref = gated_trans_ref(x, wy, by, wg, bg)
    assert out.shape == (batch, seq, out_dim)
    assert jnp.allclose(out, ref, atol=1e-5, rtol=1e-5), "mismatch vs reference"

    print("KERNEL_OK")
</pallas_src>

<mosaic_0001>
module attributes {stable_mosaic.version = 11 : i64} {
  func.func @_gated_trans_kernel(%arg0: i32, %arg1: memref<16x32xf32, #tpu.memory_space<vmem>>, %arg2: memref<32x256xf32, #tpu.memory_space<vmem>>, %arg3: memref<1x256xf32, #tpu.memory_space<vmem>>, %arg4: memref<16x128xf32, #tpu.memory_space<vmem>>) attributes {dimension_semantics = [#tpu.dimension_semantics<parallel>], iteration_bounds = array<i64: 1>, scalar_prefetch = 0 : i64, scratch_operands = 0 : i64, tpu.core_type = #tpu.core_type<tc>, window_params = [{transform_indices = @transform_0, window_bounds = array<i64: 16, 32>}, {pipeline_mode = #tpu.pipeline_mode<synchronous>, transform_indices = @transform_1, window_bounds = array<i64: 32, 256>}, {pipeline_mode = #tpu.pipeline_mode<synchronous>, transform_indices = @transform_2, window_bounds = array<i64: 1, 256>}, {transform_indices = @transform_3, window_bounds = array<i64: 16, 128>}]} {
    %c0 = arith.constant 0 : index
    %c0_0 = arith.constant 0 : index
    %0 = vector.load %arg1[%c0, %c0_0] : memref<16x32xf32, #tpu.memory_space<vmem>>, vector<16x32xf32>
    %c0_1 = arith.constant 0 : index
    %c0_2 = arith.constant 0 : index
    %1 = vector.load %arg2[%c0_1, %c0_2] : memref<32x256xf32, #tpu.memory_space<vmem>>, vector<32x256xf32>
    %cst = arith.constant dense<0.000000e+00> : vector<16x256xf32>
    %2 = tpu.matmul %0, %1, %cst {dimension_numbers = #tpu.dot_dimension_numbers<[1], [0], [0], [1], [0, 0, 1, 1], [], []>} : vector<16x32xf32>, vector<32x256xf32>, vector<16x256xf32> -> vector<16x256xf32>
    %c0_3 = arith.constant 0 : index
    %c0_4 = arith.constant 0 : index
    %3 = vector.load %arg3[%c0_3, %c0_4] : memref<1x256xf32, #tpu.memory_space<vmem>>, vector<1x256xf32>
    %4 = vector.broadcast %3 : vector<1x256xf32> to vector<16x256xf32>
    %5 = arith.addf %2, %4 : vector<16x256xf32>
    %6 = vector.extract_strided_slice %5 {offsets = [0, 0], sizes = [16, 128], strides = [1, 1]} : vector<16x256xf32> to vector<16x128xf32>
    %7 = vector.extract_strided_slice %5 {offsets = [0, 128], sizes = [16, 128], strides = [1, 1]} : vector<16x256xf32> to vector<16x128xf32>
    %8 = math.tanh %6 : vector<16x128xf32>
    %cst_5 = arith.constant 0.000000e+00 : f32
    %9 = vector.broadcast %cst_5 : f32 to vector<16x128xf32>
    %10 = arith.cmpf ogt, %7, %9 : vector<16x128xf32>
    %cst_6 = arith.constant 0.00999999977 : f32
    %11 = vector.broadcast %cst_6 : f32 to vector<16x128xf32>
    %12 = arith.mulf %11, %7 : vector<16x128xf32>
    %13 = arith.select %10, %7, %12 : vector<16x128xi1>, vector<16x128xf32>
    %14 = arith.mulf %8, %13 : vector<16x128xf32>
    %c0_7 = arith.constant 0 : index
    %c0_8 = arith.constant 0 : index
    %15 = vector.load %arg4[%c0_7, %c0_8] : memref<16x128xf32, #tpu.memory_space<vmem>>, vector<16x128xf32>
    tpu.vector_store %arg4[%c0_7, %c0_8], %14 {strides = array<i32>} : memref<16x128xf32, #tpu.memory_space<vmem>>, vector<16x128xf32>,
    return
  }
  func.func @transform_0(%arg0: i32) -> (i32, i32) {
    %c0_i32 = arith.constant 0 : i32
    %c0_i32_0 = arith.constant 0 : i32
    return %arg0, %c0_i32 : i32, i32
  }
  func.func @transform_1(%arg0: i32) -> (i32, i32) {
    %c0_i32 = arith.constant 0 : i32
    %c0_i32_0 = arith.constant 0 : i32
    %c0_i32_1 = arith.constant 0 : i32
    return %c0_i32, %c0_i32_0 : i32, i32
  }
  func.func @transform_2(%arg0: i32) -> (i32, i32) {
    %c0_i32 = arith.constant 0 : i32
    %c0_i32_0 = arith.constant 0 : i32
    %c0_i32_1 = arith.constant 0 : i32
    return %c0_i32, %c0_i32_0 : i32, i32
  }
  func.func @transform_3(%arg0: i32) -> (i32, i32) {
    %c0_i32 = arith.constant 0 : i32
    %c0_i32_0 = arith.constant 0 : i32
    return %arg0, %c0_i32 : i32, i32
  }
}

</mosaic_0001>

<llo_original>
// kernel: tpu_custom_call.1
$region0: #{tpu_custom_call.1}
  #allocation0 [shape = 'u32[]', space=smem, size = 0x4, offset = 0x4, fixed_abs, tag = 'smem constant byte address 0x4 - core index']
  #allocation1 [shape = 'u32[144,128]{1,0:T(1,128)}', space=vmem, size = 0x12000, scoped, tag = 'internal scratch']
  %s0 = inlined_call_operand.hbm [shape: f32[16,32], index: 0, kind: input, shape index: {}]
  %s1 = inlined_call_operand.hbm [shape: f32[32,256], index: 1, kind: input, shape index: {}]
  %s2 = inlined_call_operand.vmem [shape: f32[1,256], index: 2, kind: input, shape index: {}]
  %s3 = inlined_call_operand.hbm [shape: f32[16,128], index: 3, kind: output, shape index: {}]
  %s4 = sld [smem:[#allocation0]]
  $region30: #{tpu_custom_call.1} parent=0
    _
  %s6 = ssub.s32 1, %s4
  %s7 = scalar_select 0, %s6, %s4
  $region1: #{tpu_custom_call.1} parent=0
    #allocation2 [shape = 'u8[8192]{0}', space=vmem, size = 0x2000, scoped, tag = 'input window, operand 0, single buffered']
    #allocation3 [shape = 's32[1]{0}', space=sflag, size = 0x4, scoped, tag = 'scoped memory for tpu_custom_call.1']
    #allocation4 [shape = 's32[1]{0}', space=sflag, size = 0x4, scoped, tag = 'scoped memory for tpu_custom_call.1']
    #allocation5 [shape = 'u8[32768]{0}', space=vmem, size = 0x8000, scoped, tag = 'input window, operand 1, single buffered']
    #allocation6 [shape = 's32[1]{0}', space=sflag, size = 0x4, scoped, tag = 'scoped memory for tpu_custom_call.1']
    #allocation7 [shape = 'u8[8192]{0}', space=vmem, size = 0x2000, scoped, tag = 'output window, operand 0, single buffered']
    %8 = vsyncpa [#allocation3], 0
    %9 = vsyncpa [#allocation6], 0
    %10 = vsyncpa [#allocation4], 0
    // Predicated region
    $region2: #{tpu_custom_call.1} parent=1 // pred_check
      _
    $region3: #{tpu_custom_call.1} parent=1 // pred_check_branch
      %12 = sbr.rel (0) target = $region5
    $region4: #{tpu_custom_call.1} parent=1 // pred_region
      %s14 = ssub.s32 256, 256
      %15 = vsyncadd [#allocation3], %s14
      %s16 = sshll.u32 [#allocation2], 4
      %s17 = int_to_ptr.vmem [resolvable:$true] %s16
      %22 = dma.hbm_to_vmem [thread:$0]  %s0, 256, %s17, [#allocation3], 128, 128, 8
    $region5: #{tpu_custom_call.1} parent=1 // pred_fallthru
      _
    // Predicated region
    $region6: #{tpu_custom_call.1} parent=1 // pred_check
      _
    $region7: #{tpu_custom_call.1} parent=1 // pred_check_branch
      %24 = sbr.rel (0) target = $region9
    $region8: #{tpu_custom_call.1} parent=1 // pred_region
      %s26 = ssub.s32 1024, 1024
      %27 = vsyncadd [#allocation6], %s26
      %s28 = sshll.u32 [#allocation5], 4
      %s29 = int_to_ptr.vmem [resolvable:$true] %s28
      %34 = dma.hbm_to_vmem [thread:$0]  %s1, 1024, %s29, [#allocation6], 256, 256, 16
    $region9: #{tpu_custom_call.1} parent=1 // pred_fallthru
      _
    // Predicated region
    $region10: #{tpu_custom_call.1} parent=1 // pred_check
      _
    $region11: #{tpu_custom_call.1} parent=1 // pred_check_branch
      %36 = sbr.rel (0) target = $region13
    $region12: #{tpu_custom_call.1} parent=1 // pred_region
      _
    $region13: #{tpu_custom_call.1} parent=1 // pred_fallthru
      _
    // Predicated region
    $region14: #{tpu_custom_call.1} parent=1 // pred_check
      _
    $region15: #{tpu_custom_call.1} parent=1 // pred_check_branch
      %38 = sbr.rel (0) target = $region17
    $region16: #{tpu_custom_call.1} parent=1 // pred_region
      %39 = dma.done [#allocation3], 256
    $region17: #{tpu_custom_call.1} parent=1 // pred_fallthru
      _
    // Predicated region
    $region18: #{tpu_custom_call.1} parent=1 // pred_check
      _
    $region19: #{tpu_custom_call.1} parent=1 // pred_check_branch
      %41 = sbr.rel (0) target = $region21
    $region20: #{tpu_custom_call.1} parent=1 // pred_region
      %42 = dma.done [#allocation6], 1024
    $region21: #{tpu_custom_call.1} parent=1 // pred_fallthru
      _
    %v43 = vld [vmem:[#allocation2] sm:$0xff]
    %v44 = vld [vmem:[#allocation2 + $0x8] sm:$0xff]
    %v45 = vld [vmem:[#allocation5] sm:$0xff]
    %v46 = vld [vmem:[#allocation5 + $0x8] sm:$0xff]
    %v47 = vld [vmem:[#allocation5 + $0x10] sm:$0xff]
    %v48 = vld [vmem:[#allocation5 + $0x18] sm:$0xff]
    %v49 = vld [vmem:[#allocation5 + $0x20] sm:$0xff]
    %v50 = vld [vmem:[#allocation5 + $0x28] sm:$0xff]
    %v51 = vld [vmem:[#allocation5 + $0x30] sm:$0xff]
    %v52 = vld [vmem:[#allocation5 + $0x38] sm:$0xff]
    %v53 = vld [vmem:[%s2] sm:$0x3]
    %v55 = vlaneseq
    %v56 = vshrl.u32 %v55, 7
    %v57 = vsub.s32 0, %v56
    %v58 = vrot.slane %v53, %v57
    %v59 = vlaneseq
    %v60 = vshrl.u32 %v59, 7
    %v61 = vsub.s32 1, %v60
    %v62 = vrot.slane %v53, %v61
    %vm65 = vcmask 261120
    %v67 = vsel %vm65, %v43, 0
    %v70 = vsel %vm65, %v44, 0
    %72 = vmatprep.subr.mxu0 %v46
    %73 = vmatpush1.msra.mxu0 %v45
    %74 = vmatprep.subr.mxu0 %v48
    %75 = vmatpush1.msra.mxu0 %v47
    %76 = vmatprep.subr.mxu0 %v50
    %77 = vmatpush1.msra.mxu0 %v49
    %78 = vmatprep.subr.mxu0 %v52
    %79 = vmatpush1.msra.mxu0 %v51
    %80 = vmatprep.subr.mxu0 0.0
    %81 = vmatpush1.msra.mxu0 0.0
    %82 = vmatprep.subr.mxu0 0.0
    %83 = vmatpush1.msra.mxu0 0.0
    %84 = vmatprep.subr.mxu0 0.0
    %85 = vmatpush1.msra.mxu0 0.0
    %86 = vmatprep.subr.mxu0 0.0
    %87 = vmatpush1.msra.mxu0 0.0
    %88 = vmatprep.subr.mxu0 0.0
    %89 = vmatpush1.msra.mxu0 0.0
    %90 = vmatprep.subr.mxu0 0.0
    %91 = vmatpush1.msra.mxu0 0.0
    %92 = vmatprep.subr.mxu0 0.0
    %93 = vmatpush1.msra.mxu0 0.0
    %94 = vmatprep.subr.mxu0 0.0
    %95 = vmatpush1.msra.mxu0 0.0
    %96 = vmatprep.subr.mxu0 0.0
    %97 = vmatpush1.msra.mxu0 0.0
    %98 = vmatprep.subr.mxu0 0.0
    %99 = vmatpush1.msra.mxu0 0.0
    %100 = vmatprep.subr.mxu0 0.0
    %101 = vmatpush1.msra.mxu0 0.0
    %102 = vmatprep.subr.mxu0 0.0
    %103 = vmatpush1.msra.mxu0 0.0
    %104 = vmatprep.subr.mxu0 0.0
    %105 = vmatpush1.msra.mxu0 0.0
    %106 = vmatprep.subr.mxu0 0.0
    %107 = vmatpush1.msra.mxu0 0.0
    %108 = vmatprep.subr.mxu0 0.0
    %109 = vmatpush1.msra.mxu0 0.0
    %110 = vmatprep.subr.mxu0 0.0
    %111 = vmatpush1.msra.mxu0 0.0
    %112 = vmatprep.subr.mxu0 0.0
    %113 = vmatpush1.msra.mxu0 0.0
    %114 = vmatprep.subr.mxu0 0.0
    %115 = vmatpush1.msra.mxu0 0.0
    %116 = vmatprep.subr.mxu0 0.0
    %117 = vmatpush1.msra.mxu0 0.0
    %118 = vmatprep.subr.mxu0 0.0
    %119 = vmatpush1.msra.mxu0 0.0
    %120 = vmatprep.subr.mxu0 0.0
    %121 = vmatpush1.msra.mxu0 0.0
    %122 = vmatprep.subr.mxu0 0.0
    %123 = vmatpush1.msra.mxu0 0.0
    %124 = vmatprep.subr.mxu0 0.0
    %125 = vmatpush1.msra.mxu0 0.0
    %126 = vmatprep.subr.mxu0 0.0
    %127 = vmatpush1.msra.mxu0 0.0
    %128 = vmatprep.subr.mxu0 0.0
    %129 = vmatpush1.msra.mxu0 0.0
    %130 = vmatprep.subr.mxu0 0.0
    %131 = vmatpush1.msra.mxu0 0.0
    %132 = vmatprep.subr.mxu0 0.0
    %133 = vmatpush1.msra.mxu0 0.0
    %134 = vmatprep.subr.mxu0 0.0
    %135 = vmatpush1.msra.mxu0 0.0
    %136 = vmatprep.mubr.f32.mxu0 0.0
    %137 = vmatmul.mubr.f32.gmra.mrb[0].mxu0 %v67
    %v138 = vpop.f32.mrb[0].mxu0
    %v139 = vadd.f32 %v58, %v138
    %v140 = vpop.f32.mrb[0].mxu0
    %v141 = vadd.f32 %v62, %v140
    %142 = vmatprep.mubr.f32.mxu0 0.0
    %143 = vmatmul.mubr.f32.gmra.mrb[0].mxu0 %v70
    %v144 = vpop.f32.mrb[0].mxu0
    %v145 = vadd.f32 %v58, %v144
    %v146 = vpop.f32.mrb[0].mxu0
    %v147 = vadd.f32 %v62, %v146
    %148 = vdwg.mxu0
    %v149 = vtanh.pop %v139
    %v150 = vtanh.pop %v145
    %vm151 = vcmp.gt.f32.partialorder %v141, 0.0
    %vm152 = vcmp.gt.f32.partialorder %v147, 0.0
    %v153 = vmul.f32 %v141, 0.01
    %v154 = vmul.f32 %v147, 0.01
    %v155 = vsel %vm151, %v141, %v153
    %v156 = vsel %vm152, %v147, %v154
    %v157 = vmul.f32 %v149, %v155
    %v158 = vmul.f32 %v150, %v156
    %159 = vst [vmem:[#allocation7] sm:$0xff] %v157
    %160 = vst [vmem:[#allocation7 + $0x8] sm:$0xff] %v158
    // Predicated region
    $region22: #{tpu_custom_call.1} parent=1 // pred_check
      _
    $region23: #{tpu_custom_call.1} parent=1 // pred_check_branch
      %162 = sbr.rel (0) target = $region25
    $region24: #{tpu_custom_call.1} parent=1 // pred_region
      %s164 = ssub.s32 256, 256
      %165 = vsyncadd [#allocation4], %s164
      %s166 = sshll.u32 [#allocation7], 4
      %s167 = int_to_ptr.vmem [resolvable:$true] %s166
      %172 = dma.vmem_to_hbm [thread:$0]  %s167, 256, %s3, [#allocation4], 128, 128, 8
    $region25: #{tpu_custom_call.1} parent=1 // pred_fallthru
      _
    // Predicated region
    $region26: #{tpu_custom_call.1} parent=1 // pred_check
      _
    $region27: #{tpu_custom_call.1} parent=1 // pred_check_branch
      %174 = sbr.rel (0) target = $region29
    $region28: #{tpu_custom_call.1} parent=1 // pred_region
      %175 = dma.done [#allocation4], 256
    $region29: #{tpu_custom_call.1} parent=1 // pred_fallthru
      _
    %176 = vsyncpa [#allocation3], 1
    %177 = vsyncpa [#allocation6], 1
    %178 = vsyncpa [#allocation4], 1

</llo_original>
